<compile_context>
chip_gen: v6e
topology: v6e:2x2x1
jax: 0.10.0
libtpu: 0.0.40
codegen_flags: <defaults>
</compile_context>

<pallas_src>
import jax
import jax.numpy as jnp
from jax.experimental import pallas as pl
from jax.experimental.pallas import tpu as pltpu

# ------------------------- mit_b0 architecture constants -------------------------
EMBED_DIMS = (32, 64, 160, 256)
NUM_HEADS = (1, 2, 5, 8)
MLP_RATIOS = (4, 4, 4, 4)
DEPTHS = (2, 2, 2, 2)
SR_RATIOS = (8, 4, 2, 1)
PATCH_K = (7, 3, 3, 3)
PATCH_S = (4, 2, 2, 2)
LN_EPS = 1e-5


# ------------------------------- small helpers ------------------------------------
def _round_up(n, m):
    return -(-n // m) * m


def _row_tile(M):
    # big row tiles for pipelining; small M becomes a single full block (multiple of 8)
    return 256 if M >= 256 else _round_up(M, 8)


def _pad_rows(x, mp):
    M = x.shape[0]
    return x if mp == M else jnp.pad(x, ((0, mp - M), (0, 0)))


def _ln_f32(x_ref, g_ref, b_ref):
    x = x_ref[...].astype(jnp.float32)
    mu = jnp.mean(x, axis=-1, keepdims=True)
    xc = x - mu
    var = jnp.mean(xc * xc, axis=-1, keepdims=True)
    return xc * jax.lax.rsqrt(var + LN_EPS) * g_ref[...] + b_ref[...]


# ------------------------------- Pallas kernels ----------------------------------
def _linear_kernel(x_ref, w_ref, b_ref, o_ref):
    acc = jnp.dot(x_ref[...], w_ref[...], preferred_element_type=jnp.float32)
    o_ref[...] = (acc + b_ref[...]).astype(o_ref.dtype)


@jax.jit
def linear_pallas(x, w, b):
    """x: (M, K) bf16, w: (K, N) bf16, b: (1, N) f32 -> (M, N) bf16."""
    M, K = x.shape
    N = w.shape[1]
    tm = _row_tile(M)
    Mp = _round_up(M, tm)
    out = pl.pallas_call(
        _linear_kernel,
        out_shape=jax.ShapeDtypeStruct((Mp, N), x.dtype),
        grid=(Mp // tm,),
        in_specs=[
            pl.BlockSpec((tm, K), lambda i: (i, 0)),
            pl.BlockSpec((K, N), lambda i: (0, 0)),
            pl.BlockSpec((1, N), lambda i: (0, 0)),
        ],
        out_specs=pl.BlockSpec((tm, N), lambda i: (i, 0)),
        compiler_params=pltpu.CompilerParams(dimension_semantics=("parallel",)),
    )(_pad_rows(x, Mp), w, b)
    return out[:M] if Mp != M else out


def _ln_linear_kernel(x_ref, g_ref, bln_ref, w_ref, b_ref, o_ref):
    xn = _ln_f32(x_ref, g_ref, bln_ref)
    acc = jnp.dot(xn.astype(w_ref.dtype), w_ref[...], preferred_element_type=jnp.float32)
    o_ref[...] = (acc + b_ref[...]).astype(o_ref.dtype)


@jax.jit
def ln_linear_pallas(x, g, bln, w, b):
    """Fused LayerNorm(x) @ w + b.  x: (M, K) bf16, g/bln: (1, K) f32, w: (K, N) bf16."""
    M, K = x.shape
    N = w.shape[1]
    tm = _row_tile(M)
    Mp = _round_up(M, tm)
    out = pl.pallas_call(
        _ln_linear_kernel,
        out_shape=jax.ShapeDtypeStruct((Mp, N), x.dtype),
        grid=(Mp // tm,),
        in_specs=[
            pl.BlockSpec((tm, K), lambda i: (i, 0)),
            pl.BlockSpec((1, K), lambda i: (0, 0)),
            pl.BlockSpec((1, K), lambda i: (0, 0)),
            pl.BlockSpec((K, N), lambda i: (0, 0)),
            pl.BlockSpec((1, N), lambda i: (0, 0)),
        ],
        out_specs=pl.BlockSpec((tm, N), lambda i: (i, 0)),
        compiler_params=pltpu.CompilerParams(dimension_semantics=("parallel",)),
    )(_pad_rows(x, Mp), g, bln, w, b)
    return out[:M] if Mp != M else out


def _ln_linear_dual_kernel(x_ref, g_ref, bln_ref, w_ref, b_ref, o_ref, xn_ref):
    xn = _ln_f32(x_ref, g_ref, bln_ref)
    xn_ref[...] = xn.astype(xn_ref.dtype)
    acc = jnp.dot(xn.astype(w_ref.dtype), w_ref[...], preferred_element_type=jnp.float32)
    o_ref[...] = (acc + b_ref[...]).astype(o_ref.dtype)


@jax.jit
def ln_linear_dual_pallas(x, g, bln, w, b):
    """Fused LN + GEMM that also returns the normalized activations (for the SR path)."""
    M, K = x.shape
    N = w.shape[1]
    tm = _row_tile(M)
    Mp = _round_up(M, tm)
    out, xn = pl.pallas_call(
        _ln_linear_dual_kernel,
        out_shape=(jax.ShapeDtypeStruct((Mp, N), x.dtype),
                   jax.ShapeDtypeStruct((Mp, K), x.dtype)),
        grid=(Mp // tm,),
        in_specs=[
            pl.BlockSpec((tm, K), lambda i: (i, 0)),
            pl.BlockSpec((1, K), lambda i: (0, 0)),
            pl.BlockSpec((1, K), lambda i: (0, 0)),
            pl.BlockSpec((K, N), lambda i: (0, 0)),
            pl.BlockSpec((1, N), lambda i: (0, 0)),
        ],
        out_specs=(pl.BlockSpec((tm, N), lambda i: (i, 0)),
                   pl.BlockSpec((tm, K), lambda i: (i, 0))),
        compiler_params=pltpu.CompilerParams(dimension_semantics=("parallel",)),
    )(_pad_rows(x, Mp), g, bln, w, b)
    if Mp != M:
        out, xn = out[:M], xn[:M]
    return out, xn


def _layernorm_kernel(x_ref, g_ref, b_ref, o_ref):
    o_ref[...] = _ln_f32(x_ref, g_ref, b_ref).astype(o_ref.dtype)


@jax.jit
def layernorm_pallas(x, g, b):
    """x: (M, C) bf16, g/b: (1, C) f32 -> (M, C) bf16; row-tiled grid."""
    M, C = x.shape
    tm = _row_tile(M)
    Mp = _round_up(M, tm)
    out = pl.pallas_call(
        _layernorm_kernel,
        out_shape=jax.ShapeDtypeStruct((Mp, C), x.dtype),
        grid=(Mp // tm,),
        in_specs=[
            pl.BlockSpec((tm, C), lambda i: (i, 0)),
            pl.BlockSpec((1, C), lambda i: (0, 0)),
            pl.BlockSpec((1, C), lambda i: (0, 0)),
        ],
        out_specs=pl.BlockSpec((tm, C), lambda i: (i, 0)),
        compiler_params=pltpu.CompilerParams(dimension_semantics=("parallel",)),
    )(_pad_rows(x, Mp), g, b)
    return out[:M] if Mp != M else out


def _attn_kernel(q_ref, k_ref, v_ref, o_ref):
    # 1/sqrt(d) is already folded into the q-projection weights.
    q = q_ref[0]                                   # (h, tq, d)  bf16
    k = k_ref[0]                                   # (h, Nk, d)  bf16
    v = v_ref[0]
    s = jnp.einsum('hqd,hkd->hqk', q, k, preferred_element_type=jnp.float32)
    m = jnp.max(s, axis=-1, keepdims=True)
    p = jnp.exp(s - m)
    l = jnp.sum(p, axis=-1, keepdims=True)
    o = jnp.einsum('hqk,hkd->hqd', p.astype(v.dtype), v,
                   preferred_element_type=jnp.float32)
    o_ref[0] = (o * pl.reciprocal(l, approx=True)).astype(o_ref.dtype)


@jax.jit
def attention_pallas(q, k, v):
    """q: (B, h, N, d), k/v: (B, h, Nk, d) -> softmax(q k^T) v, shape (B, h, N, d)."""
    B, Hh, N, d = q.shape
    Nk = k.shape[2]
    if N % 256 == 0:
        tq = 256
    elif N % 128 == 0:
        tq = 128
    else:
        tq = N
    return pl.pallas_call(
        _attn_kernel,
        out_shape=jax.ShapeDtypeStruct((B, Hh, N, d), q.dtype),
        grid=(B, N // tq),
        in_specs=[
            pl.BlockSpec((1, Hh, tq, d), lambda b, i: (b, 0, i, 0)),
            pl.BlockSpec((1, Hh, Nk, d), lambda b, i: (b, 0, 0, 0)),
            pl.BlockSpec((1, Hh, Nk, d), lambda b, i: (b, 0, 0, 0)),
        ],
        out_specs=pl.BlockSpec((1, Hh, tq, d), lambda b, i: (b, 0, i, 0)),
        compiler_params=pltpu.CompilerParams(
            dimension_semantics=("parallel", "parallel")),
    )(q, k, v)


def _dwconv_gelu_kernel(x_ref, w_ref, b_ref, o_ref):
    H, W, C = o_ref.shape[1], o_ref.shape[2], o_ref.shape[3]
    xp = x_ref[...]                                # (1, H+2, W+2, tc) bf16
    acc = jnp.zeros(o_ref.shape, jnp.float32)
    for i in range(3):
        for j in range(3):
            wij = w_ref[i * 3 + j: i * 3 + j + 1, :].reshape(1, 1, 1, C)
            acc = acc + xp[:, i:i + H, j:j + W, :].astype(jnp.float32) * wij
    acc = acc + b_ref[...].reshape(1, 1, 1, C)
    o_ref[...] = jax.nn.gelu(acc, approximate=False).astype(o_ref.dtype)


@jax.jit
def dwconv_gelu_pallas(xpad, w9, b):
    """xpad: (B, H+2, W+2, C) zero-padded NHWC bf16, w9: (9, C) f32, b: (1, C) f32."""
    B, Hp, Wp, C = xpad.shape
    H, W = Hp - 2, Wp - 2
    tc = 128 if C % 128 == 0 else C
    return pl.pallas_call(
        _dwconv_gelu_kernel,
        out_shape=jax.ShapeDtypeStruct((B, H, W, C), xpad.dtype),
        grid=(B, C // tc),
        in_specs=[
            pl.BlockSpec((1, Hp, Wp, tc), lambda bi, ci: (bi, 0, 0, ci)),
            pl.BlockSpec((9, tc), lambda bi, ci: (0, ci)),
            pl.BlockSpec((1, tc), lambda bi, ci: (0, ci)),
        ],
        out_specs=pl.BlockSpec((1, H, W, tc), lambda bi, ci: (bi, 0, 0, ci)),
        compiler_params=pltpu.CompilerParams(
            dimension_semantics=("parallel", "parallel")),
    )(xpad, w9, b)


# ------------------------------- JAX glue (no MACs) -------------------------------
def _im2col(x, k, stride, pad):
    """x: (B, C, H, W) -> (B, Ho*Wo, C*k*k) with PyTorch Conv2d weight flattening order."""
    B, C, H, W = x.shape
    if pad > 0:
        x = jnp.pad(x, ((0, 0), (0, 0), (pad, pad), (pad, pad)))
    Ho = (H + 2 * pad - k) // stride + 1
    Wo = (W + 2 * pad - k) // stride + 1
    cols = []
    for i in range(k):
        for j in range(k):
            cols.append(x[:, :, i:i + stride * Ho:stride, j:j + stride * Wo:stride])
    col = jnp.stack(cols, axis=2)                       # (B, C, k*k, Ho, Wo)
    col = col.transpose(0, 3, 4, 1, 2).reshape(B, Ho * Wo, C * k * k)
    return col, Ho, Wo


def conv2d_pallas(x_nchw, wmat, bias, k, stride, pad):
    """Conv2d via im2col + Pallas GEMM. Returns tokens (B, Ho*Wo, Cout), Ho, Wo."""
    B = x_nchw.shape[0]
    col, Ho, Wo = _im2col(x_nchw, k, stride, pad)
    K = col.shape[-1]
    y = linear_pallas(col.reshape(B * Ho * Wo, K), wmat, bias)
    return y.reshape(B, Ho * Wo, -1), Ho, Wo


def layer_norm(x, g, b):
    B, N, C = x.shape
    return layernorm_pallas(x.reshape(B * N, C), g, b).reshape(B, N, C)


def linear(x, w, b):
    B, N, C = x.shape
    return linear_pallas(x.reshape(B * N, C), w, b).reshape(B, N, -1)


def ln_linear(x, g, bln, w, b):
    B, N, C = x.shape
    return ln_linear_pallas(x.reshape(B * N, C), g, bln, w, b).reshape(B, N, -1)


def ln_linear_dual(x, g, bln, w, b):
    B, N, C = x.shape
    o, xn = ln_linear_dual_pallas(x.reshape(B * N, C), g, bln, w, b)
    return o.reshape(B, N, -1), xn.reshape(B, N, C)


# ------------------------------- MiT-b0 modules -----------------------------------
def attention_module(x, H, W, p, num_heads, sr_ratio):
    """norm1 is fused inside (LN->qkv or LN->q); scale folded into q weights."""
    B, N, C = x.shape
    hd = C // num_heads
    if sr_ratio == 1:
        qkv = ln_linear(x, p['n1_w'], p['n1_b'], p['qkv_w'], p['qkv_b'])   # (B, N, 3C)
        q, kv = qkv[..., :C], qkv[..., C:]
        Ns = N
    else:
        q, xn = ln_linear_dual(x, p['n1_w'], p['n1_b'], p['q_w'], p['q_b'])
        xs = xn.transpose(0, 2, 1).reshape(B, C, H, W)
        xr, _, _ = conv2d_pallas(xs, p['sr_w'], p['sr_b'], sr_ratio, sr_ratio, 0)
        kv = ln_linear(xr, p['srn_w'], p['srn_b'], p['kv_w'], p['kv_b'])   # (B, Ns, 2C)
        Ns = kv.shape[1]
    q = q.reshape(B, N, num_heads, hd).transpose(0, 2, 1, 3)              # (B, h, N, d)
    kv = kv.reshape(B, Ns, 2, num_heads, hd).transpose(2, 0, 3, 1, 4)     # (2, B, h, Ns, d)
    o = attention_pallas(q, kv[0], kv[1])                                 # (B, h, N, d)
    o = o.transpose(0, 2, 1, 3).reshape(B, N, C)
    return linear(o, p['proj_w'], p['proj_b'])


def mlp_module(x, H, W, p):
    """norm2 fused into fc1; DWConv3x3 + exact-erf GELU fused in one kernel."""
    B, N, C = x.shape
    h = ln_linear(x, p['n2_w'], p['n2_b'], p['fc1_w'], p['fc1_b'])         # (B, N, hid)
    hid = h.shape[-1]
    hp = jnp.pad(h.reshape(B, H, W, hid), ((0, 0), (1, 1), (1, 1), (0, 0)))
    g = dwconv_gelu_pallas(hp, p['dw_w'], p['dw_b'])
    return linear(g.reshape(B, N, hid), p['fc2_w'], p['fc2_b'])


def block_module(x, H, W, p, num_heads, sr_ratio):
    x = x + attention_module(x, H, W, p, num_heads, sr_ratio)
    x = x + mlp_module(x, H, W, p)
    return x


def mit_forward(x_nchw, params):
    """MixVisionTransformer (mit_b0) forward_features -> list of 4 NCHW feature maps."""
    outs = []
    x = x_nchw.astype(jnp.bfloat16)
    B = x.shape[0]
    for si in range(4):
        sp = params[f'stage{si}']
        k, s = PATCH_K[si], PATCH_S[si]
        tokens, H, W = conv2d_pallas(x, sp['pe_w'], sp['pe_b'], k, s, k // 2)
        tokens = layer_norm(tokens, sp['pe_n_w'], sp['pe_n_b'])
        for bi in range(DEPTHS[si]):
            tokens = block_module(tokens, H, W, sp[f'block{bi}'],
                                  NUM_HEADS[si], SR_RATIOS[si])
        tokens = layer_norm(tokens, sp['n_w'], sp['n_b'])
        x = tokens.reshape(B, H, W, EMBED_DIMS[si]).transpose(0, 3, 1, 2)  # NCHW, bf16
        outs.append(x.astype(jnp.float32))
    return outs


@jax.jit
def _encoder_jit(rgb, t, params_rgb, params_t):
    return mit_forward(rgb, params_rgb), mit_forward(t, params_t)


def encoder_rgbt_segformer(rgb, t, params_rgb, params_t):
    """Matches Encoder_RGBT_Segformer.forward(rgb, t=None) -> (rgb_feats, t_feats)."""
    if t is None:
        t = rgb
    return _encoder_jit(rgb, t, params_rgb, params_t)


# ------------------------------- parameter init ------------------------------------
def init_mit_b0_params(key):
    """Raw synthetic f32 weights (PyTorch layout, flattened GEMM form)."""
    keys = iter(jax.random.split(key, 512))

    def nrm(shape, std=0.02):
        return jax.random.normal(next(keys), shape, jnp.float32) * std

    params = {}
    in_ch = 3
    for si in range(4):
        C = EMBED_DIMS[si]
        k = PATCH_K[si]
        hid = C * MLP_RATIOS[si]
        sr = SR_RATIOS[si]
        sp = {
            'pe_w': nrm((in_ch * k * k, C)), 'pe_b': jnp.zeros((C,)),
            'pe_n_w': jnp.ones((C,)), 'pe_n_b': jnp.zeros((C,)),
            'n_w': jnp.ones((C,)), 'n_b': jnp.zeros((C,)),
        }
        for bi in range(DEPTHS[si]):
            attn_p = {
                'q_w': nrm((C, C)), 'q_b': jnp.zeros((C,)),
                'kv_w': nrm((C, 2 * C)), 'kv_b': jnp.zeros((2 * C,)),
                'proj_w': nrm((C, C)), 'proj_b': jnp.zeros((C,)),
            }
            if sr > 1:
                attn_p.update({
                    'sr_w': nrm((C * sr * sr, C)), 'sr_b': jnp.zeros((C,)),
                    'srn_w': jnp.ones((C,)), 'srn_b': jnp.zeros((C,)),
                })
            mlp_p = {
                'fc1_w': nrm((C, hid)), 'fc1_b': jnp.zeros((hid,)),
                'dw_w': nrm((9, hid)), 'dw_b': jnp.zeros((hid,)),
                'fc2_w': nrm((hid, C)), 'fc2_b': jnp.zeros((C,)),
            }
            sp[f'block{bi}'] = {
                'n1_w': jnp.ones((C,)), 'n1_b': jnp.zeros((C,)),
                'n2_w': jnp.ones((C,)), 'n2_b': jnp.zeros((C,)),
                'attn': attn_p, 'mlp': mlp_p,
            }
        params[f'stage{si}'] = sp
        in_ch = C
    return params


def prepare_params(raw):
    """Kernel-ready params: bf16 GEMM weights, f32 (1, C) bias/LN rows,
    1/sqrt(head_dim) folded into the q projection, q & kv concatenated into a
    single qkv GEMM when sr_ratio == 1."""
    bf16 = jnp.bfloat16

    def row(v):
        return v.reshape(1, -1).astype(jnp.float32)

    out = {}
    for si in range(4):
        sp = raw[f'stage{si}']
        C = EMBED_DIMS[si]
        sr = SR_RATIOS[si]
        scale = float(C // NUM_HEADS[si]) ** -0.5
        ps = {
            'pe_w': sp['pe_w'].astype(bf16), 'pe_b': row(sp['pe_b']),
            'pe_n_w': row(sp['pe_n_w']), 'pe_n_b': row(sp['pe_n_b']),
            'n_w': row(sp['n_w']), 'n_b': row(sp['n_b']),
        }
        for bi in range(DEPTHS[si]):
            bp = sp[f'block{bi}']
            ap, mp = bp['attn'], bp['mlp']
            q_w, q_b = ap['q_w'] * scale, ap['q_b'] * scale
            pb = {
                'n1_w': row(bp['n1_w']), 'n1_b': row(bp['n1_b']),
                'n2_w': row(bp['n2_w']), 'n2_b': row(bp['n2_b']),
                'proj_w': ap['proj_w'].astype(bf16), 'proj_b': row(ap['proj_b']),
                'fc1_w': mp['fc1_w'].astype(bf16), 'fc1_b': row(mp['fc1_b']),
                'dw_w': mp['dw_w'].astype(jnp.float32), 'dw_b': row(mp['dw_b']),
                'fc2_w': mp['fc2_w'].astype(bf16), 'fc2_b': row(mp['fc2_b']),
            }
            if sr == 1:
                pb['qkv_w'] = jnp.concatenate([q_w, ap['kv_w']], axis=1).astype(bf16)
                pb['qkv_b'] = jnp.concatenate([q_b, ap['kv_b']]).reshape(1, -1)
            else:
                pb['q_w'] = q_w.astype(bf16)
                pb['q_b'] = row(q_b)
                pb['kv_w'] = ap['kv_w'].astype(bf16)
                pb['kv_b'] = row(ap['kv_b'])
                pb['sr_w'] = ap['sr_w'].astype(bf16)
                pb['sr_b'] = row(ap['sr_b'])
                pb['srn_w'] = row(ap['srn_w'])
                pb['srn_b'] = row(ap['srn_b'])
            ps[f'block{bi}'] = pb
        out[f'stage{si}'] = ps
    return out


# ----------------------------------- main -------------------------------------------
if __name__ == "__main__":
    root = jax.random.PRNGKey(0)
    k_in, k_rgb, k_t = jax.random.split(root, 3)

    # small input consistent with the module: batch=2, 3 channels, 64x64 spatial
    # (min divisible spatial for the 4-stage /32 downsampling pyramid + sr_ratio=8)
    rgb = jax.random.normal(k_in, (2, 3, 64, 64), jnp.float32)

    params_rgb = prepare_params(init_mit_b0_params(k_rgb))   # enc_rgb
    params_t = prepare_params(init_mit_b0_params(k_t))       # enc_t

    # forward with t=None (module falls back to t = rgb)
    rgb_feats, t_feats = encoder_rgbt_segformer(rgb, None, params_rgb, params_t)
    jax.block_until_ready((rgb_feats, t_feats))

    # sanity: 4 pyramid levels per modality, NCHW
    expected = [(2, 32, 16, 16), (2, 64, 8, 8), (2, 160, 4, 4), (2, 256, 2, 2)]
    assert [tuple(f.shape) for f in rgb_feats] == expected
    assert [tuple(f.shape) for f in t_feats] == expected
    assert all(bool(jnp.all(jnp.isfinite(f))) for f in rgb_feats + t_feats)

    print("KERNEL_OK")
</pallas_src>

<mosaic_0001>
module attributes {stable_mosaic.version = 11 : i64} {
  func.func @_linear_kernel(%arg0: i32, %arg1: memref<256x147xbf16, #tpu.memory_space<vmem>>, %arg2: memref<147x32xbf16, #tpu.memory_space<vmem>>, %arg3: memref<1x32xf32, #tpu.memory_space<vmem>>, %arg4: memref<256x32xbf16, #tpu.memory_space<vmem>>) attributes {dimension_semantics = [#tpu.dimension_semantics<parallel>], iteration_bounds = array<i64: 2>, scalar_prefetch = 0 : i64, scratch_operands = 0 : i64, tpu.core_type = #tpu.core_type<tc>, window_params = [{transform_indices = @transform_0, window_bounds = array<i64: 256, 147>}, {pipeline_mode = #tpu.pipeline_mode<synchronous>, transform_indices = @transform_1, window_bounds = array<i64: 147, 32>}, {pipeline_mode = #tpu.pipeline_mode<synchronous>, transform_indices = @transform_2, window_bounds = array<i64: 1, 32>}, {transform_indices = @transform_3, window_bounds = array<i64: 256, 32>}]} {
    %c0 = arith.constant 0 : index
    %c0_0 = arith.constant 0 : index
    %0 = vector.load %arg1[%c0, %c0_0] : memref<256x147xbf16, #tpu.memory_space<vmem>>, vector<256x147xbf16>
    %c0_1 = arith.constant 0 : index
    %c0_2 = arith.constant 0 : index
    %1 = vector.load %arg2[%c0_1, %c0_2] : memref<147x32xbf16, #tpu.memory_space<vmem>>, vector<147x32xbf16>
    %cst = arith.constant dense<0.000000e+00> : vector<256x32xf32>
    %2 = tpu.matmul %0, %1, %cst {dimension_numbers = #tpu.dot_dimension_numbers<[1], [0], [0], [1], [0, 0, 1, 1], [], []>} : vector<256x147xbf16>, vector<147x32xbf16>, vector<256x32xf32> -> vector<256x32xf32>
    %c0_3 = arith.constant 0 : index
    %c0_4 = arith.constant 0 : index
    %3 = vector.load %arg3[%c0_3, %c0_4] : memref<1x32xf32, #tpu.memory_space<vmem>>, vector<1x32xf32>
    %4 = vector.broadcast %3 : vector<1x32xf32> to vector<256x32xf32>
    %5 = arith.addf %2, %4 : vector<256x32xf32>
    %6 = arith.truncf %5 : vector<256x32xf32> to vector<256x32xbf16>
    %c0_5 = arith.constant 0 : index
    %c0_6 = arith.constant 0 : index
    %7 = vector.load %arg4[%c0_5, %c0_6] : memref<256x32xbf16, #tpu.memory_space<vmem>>, vector<256x32xbf16>
    tpu.vector_store %arg4[%c0_5, %c0_6], %6 {strides = array<i32>} : memref<256x32xbf16, #tpu.memory_space<vmem>>, vector<256x32xbf16>,
    return
  }
  func.func @transform_0(%arg0: i32) -> (i32, i32) {
    %c0_i32 = arith.constant 0 : i32
    %c0_i32_0 = arith.constant 0 : i32
    return %arg0, %c0_i32 : i32, i32
  }
  func.func @transform_1(%arg0: i32) -> (i32, i32) {
    %c0_i32 = arith.constant 0 : i32
    %c0_i32_0 = arith.constant 0 : i32
    %c0_i32_1 = arith.constant 0 : i32
    return %c0_i32, %c0_i32_0 : i32, i32
  }
  func.func @transform_2(%arg0: i32) -> (i32, i32) {
    %c0_i32 = arith.constant 0 : i32
    %c0_i32_0 = arith.constant 0 : i32
    %c0_i32_1 = arith.constant 0 : i32
    return %c0_i32, %c0_i32_0 : i32, i32
  }
  func.func @transform_3(%arg0: i32) -> (i32, i32) {
    %c0_i32 = arith.constant 0 : i32
    %c0_i32_0 = arith.constant 0 : i32
    return %arg0, %c0_i32 : i32, i32
  }
}

</mosaic_0001>

<llo_original>
// kernel: linear_pallas.1
$region0: #{linear_pallas.1}
  #allocation0 [shape = 'u32[]', space=smem, size = 0x4, offset = 0x4, fixed_abs, tag = 'smem constant byte address 0x4 - core index']
  #allocation1 [shape = 'u32[144,128]{1,0:T(1,128)}', space=vmem, size = 0x12000, scoped, tag = 'internal scratch']
  %s0 = inlined_call_operand.vmem [shape: bf16[512,147], index: 0, kind: input, shape index: {}]
  %s1 = inlined_call_operand.vmem [shape: bf16[147,32], index: 1, kind: input, shape index: {}]
  %s2 = inlined_call_operand.vmem [shape: f32[1,32], index: 2, kind: input, shape index: {}]
  %s3 = inlined_call_operand.vmem [shape: bf16[512,32], index: 3, kind: output, shape index: {}]
  %s4 = sld [smem:[#allocation0]]
  $region45: #{linear_pallas.1} parent=0
    _
  %s6 = ssub.s32 1, %s4
  %s7 = scalar_select 0, %s6, %s4
  loop: start=0, step=1, limit=4
  $region2: #{linear_pallas.1} parent=0 // loop_pre_header
    _
  $region3: #{linear_pallas.1} parent=0 // loop_header
    %s9 = sphi 0, %s13
    %p10 = scmp.ge.s32.totalorder %s9, 4
    %s19 = sphi 0, %s21
    %s22 = sphi 0, %s19
    %s23 = sphi 0, %s22
    %s39 = sphi 0, %s23
    %s43 = sphi 0, %s43
    %s45 = sphi 0, %s43
    %s46 = sphi 0, %s45
    %s60 = sphi 0, %s46
    %s64 = sphi 0, %s64
    %s66 = sphi 0, %s64
    %s67 = sphi 0, %s66
    %s81 = sphi 0, %s67
    %s87 = sphi 0, %s89
    %s90 = sphi 0, %s87
    %s91 = sphi 0, %s90
    %s107 = sphi 0, %s91
  $region4: #{linear_pallas.1} parent=0 // loop_header_branch
    %12 = sbr.rel (%p10) target = $region8
  $region5: #{linear_pallas.1} parent=0 // loop_body
    %s14 = ssub.s32 %s9, 1
    %s15 = ssub.s32 %s9, 2
    %s16 = sadd.s32 %s9, 1
    %s17 = ssub.s32 %s9, %s16
    %p18 = scmp.eq.s32.totalorder %s17, 0
    %s20 = sadd.s32 %s19, 1
    %s21 = scalar_select %p18, %s19, %s20
    %p24 = pneg %p18
    %p25 = scmp.eq.s32.totalorder %s9, 1
    %p26 = por %p24, %p25
    %p27 = scmp.ne.s32.totalorder %s19, %s22
    %p28 = scmp.eq.s32.totalorder %s9, 0
    %p29 = por %p27, %p28
    %p30 = scmp.ne.s32.totalorder %s19, %s22
    %p31 = scmp.eq.s32.totalorder %s14, 1
    %p32 = por %p30, %p31
    %p33 = scmp.ne.s32.totalorder %s22, %s23
    %p34 = scmp.eq.s32.totalorder %s14, 0
    %p35 = por %p33, %p34
    %p36 = scmp.ne.s32.totalorder %s22, %s23
    %p37 = scmp.eq.s32.totalorder %s15, 1
    %p38 = por %p36, %p37
    %p40 = scmp.ne.s32.totalorder %s23, %s39
    %p41 = scmp.eq.s32.totalorder %s15, 0
    %p42 = por %p40, %p41
    %s44 = sadd.s32 %s43, 1
    %p47 = scmp.eq.s32.totalorder %s9, 1
    %p48 = scmp.ne.s32.totalorder %s43, %s45
    %p49 = scmp.eq.s32.totalorder %s9, 0
    %p50 = por %p48, %p49
    %p51 = scmp.ne.s32.totalorder %s43, %s45
    %p52 = scmp.eq.s32.totalorder %s14, 1
    %p53 = por %p51, %p52
    %p54 = scmp.ne.s32.totalorder %s45, %s46
    %p55 = scmp.eq.s32.totalorder %s14, 0
    %p56 = por %p54, %p55
    %p57 = scmp.ne.s32.totalorder %s45, %s46
    %p58 = scmp.eq.s32.totalorder %s15, 1
    %p59 = por %p57, %p58
    %p61 = scmp.ne.s32.totalorder %s46, %s60
    %p62 = scmp.eq.s32.totalorder %s15, 0
    %p63 = por %p61, %p62
    %s65 = sadd.s32 %s64, 1
    %p68 = scmp.eq.s32.totalorder %s9, 1
    %p69 = scmp.ne.s32.totalorder %s64, %s66
    %p70 = scmp.eq.s32.totalorder %s9, 0
    %p71 = por %p69, %p70
    %p72 = scmp.ne.s32.totalorder %s64, %s66
    %p73 = scmp.eq.s32.totalorder %s14, 1
    %p74 = por %p72, %p73
    %p75 = scmp.ne.s32.totalorder %s66, %s67
    %p76 = scmp.eq.s32.totalorder %s14, 0
    %p77 = por %p75, %p76
    %p78 = scmp.ne.s32.totalorder %s66, %s67
    %p79 = scmp.eq.s32.totalorder %s15, 1
    %p80 = por %p78, %p79
    %p82 = scmp.ne.s32.totalorder %s67, %s81
    %p83 = scmp.eq.s32.totalorder %s15, 0
    %p84 = por %p82, %p83
    %s85 = ssub.s32 %s9, %s16
    %p86 = scmp.eq.s32.totalorder %s85, 0
    %s88 = sadd.s32 %s87, 1
    %s89 = scalar_select %p86, %s87, %s88
    %p92 = pneg %p86
    %p93 = scmp.eq.s32.totalorder %s9, 1
    %p94 = por %p92, %p93
    %p95 = scmp.ne.s32.totalorder %s87, %s90
    %p96 = scmp.eq.s32.totalorder %s9, 0
    %p97 = por %p95, %p96
    %p98 = scmp.ne.s32.totalorder %s87, %s90
    %p99 = scmp.eq.s32.totalorder %s14, 1
    %p100 = por %p98, %p99
    %p101 = scmp.ne.s32.totalorder %s90, %s91
    %p102 = scmp.eq.s32.totalorder %s14, 0
    %p103 = por %p101, %p102
    %p104 = scmp.ne.s32.totalorder %s90, %s91
    %p105 = scmp.eq.s32.totalorder %s15, 1
    %p106 = por %p104, %p105
    %p108 = scmp.ne.s32.totalorder %s91, %s107
    %p109 = scmp.eq.s32.totalorder %s15, 0
    %p110 = por %p108, %p109
    %p111 = scmp.le.s32.totalorder 1, %s9
    %p112 = scmp.lt.s32.totalorder %s9, 3
    %p113 = pnand %p111, %p112
    %p114 = pneg %p113
    // Predicated region
    $region9: #{linear_pallas.1} parent=5 // pred_check
      _
    $region10: #{linear_pallas.1} parent=5 // pred_check_branch
      %116 = sbr.rel (%p113) target = $region12
    $region11: #{linear_pallas.1} parent=5 // pred_region
      %s117 = ssub.s32 %s9, 1
      // Predicated region
      $region13: #{linear_pallas.1} parent=11 // pred_check
        %p118 = pneg %p56
      $region14: #{linear_pallas.1} parent=11 // pred_check_branch
        %120 = sbr.rel (%p118) target = $region16
      $region15: #{linear_pallas.1} parent=11 // pred_region
        _
      $region16: #{linear_pallas.1} parent=11 // pred_fallthru
        _
      // Predicated region
      $region17: #{linear_pallas.1} parent=11 // pred_check
        %p121 = pneg %p77
      $region18: #{linear_pallas.1} parent=11 // pred_check_branch
        %123 = sbr.rel (%p121) target = $region20
      $region19: #{linear_pallas.1} parent=11 // pred_region
        _
      $region20: #{linear_pallas.1} parent=11 // pred_fallthru
        _
    $region12: #{linear_pallas.1} parent=5 // pred_fallthru
      _
    %p124 = scmp.lt.s32.totalorder %s9, 2
    // Predicated region
    $region21: #{linear_pallas.1} parent=5 // pred_check
      %p125 = pneg %p124
    $region22: #{linear_pallas.1} parent=5 // pred_check_branch
      %127 = sbr.rel (%p125) target = $region24
    $region23: #{linear_pallas.1} parent=5 // pred_region
      // Predicated region
      $region25: #{linear_pallas.1} parent=23 // pred_check
        %p128 = pneg %p29
      $region26: #{linear_pallas.1} parent=23 // pred_check_branch
        %130 = sbr.rel (%p128) target = $region28
      $region27: #{linear_pallas.1} parent=23 // pred_region
        %s131 = smul.u32 32, %s9
        %p132 = scmp.lt.s32.totalorder %s131, 63
        %s133 = scalar_select %p132, %s131, 63
        %s134 = smul.addr %s133, 2
        %s135 = smul.addr %s134, 4
        %s136 = scalar_lea.vmem %s0, %s135
        %s137 = smul.u32 32, %s9
      $region28: #{linear_pallas.1} parent=23 // pred_fallthru
        _
    $region24: #{linear_pallas.1} parent=5 // pred_fallthru
      _
    %p138 = scmp.le.s32.totalorder 1, %s9
    %p139 = scmp.lt.s32.totalorder %s9, 3
    %p140 = pnand %p138, %p139
    %p141 = pneg %p140
    // Predicated region
    $region29: #{linear_pallas.1} parent=5 // pred_check
      _
    $region30: #{linear_pallas.1} parent=5 // pred_check_branch
      %143 = sbr.rel (%p140) target = $region32
    $region31: #{linear_pallas.1} parent=5 // pred_region
      %s144 = ssub.s32 %s9, 1
      %s145 = smul.u32 32, %s14
      %p146 = scmp.lt.s32.totalorder %s145, 63
      %s147 = scalar_select %p146, %s145, 63
      %s148 = smul.addr %s147, 2
      %s149 = smul.addr %s148, 4
      %s150 = scalar_lea.vmem %s0, %s149
      %p151 = pneg %p35
      %p152 = pneg %p32
      %p153 = pneg %p56
      %p154 = pneg %p53
      %p155 = pneg %p77
      %p156 = pneg %p74
      %p157 = pneg %p103
      %p158 = pneg %p100
      %s159 = smul.u32 32, %s14
      %p160 = scmp.lt.s32.totalorder %s159, 63
      %s161 = scalar_select %p160, %s159, 63
      %s162 = smul.addr %s161, 4
      %s163 = scalar_lea.vmem %s3, %s162
      %s164 = smul.u32 32, %s14
      %p165 = scmp.lt.s32.totalorder %s164, 63
      %s166 = scalar_select %p165, %s164, 63
      %s167 = smul.addr %s166, 2
      %s168 = smul.addr %s167, 4
      %s169 = scalar_lea.vmem %s0, %s168
      %s170 = smul.u32 32, %s14
      %s171 = smul.u32 32, %s14
      %p172 = scmp.lt.s32.totalorder %s171, 63
      %s173 = scalar_select %p172, %s171, 63
      %s174 = smul.addr %s173, 4
      %s175 = scalar_lea.vmem %s3, %s174
      %s176 = smul.u32 32, %s14
      %v178 = vld [vmem:[%s169] sm:$0xff]
      %v179 = vld [vmem:[%s169 + $0x8] sm:$0xff]
      %v180 = vld [vmem:[%s169 + $0x10] sm:$0xff]
      %v181 = vld [vmem:[%s169 + $0x18] sm:$0xff]
      %v182 = vld [vmem:[%s169 + $0x20] sm:$0xff]
      %v183 = vld [vmem:[%s169 + $0x28] sm:$0xff]
      %v184 = vld [vmem:[%s169 + $0x30] sm:$0xff]
      %v185 = vld [vmem:[%s169 + $0x38] sm:$0xff]
      %v186 = vld [vmem:[%s169 + $0x40] sm:$0xff]
      %v187 = vld [vmem:[%s169 + $0x48] sm:$0xff]
      %v188 = vld [vmem:[%s169 + $0x50] sm:$0xff]
      %v189 = vld [vmem:[%s169 + $0x58] sm:$0xff]
      %v190 = vld [vmem:[%s169 + $0x60] sm:$0xff]
      %v191 = vld [vmem:[%s169 + $0x68] sm:$0xff]
      %v192 = vld [vmem:[%s169 + $0x70] sm:$0xff]
      %v193 = vld [vmem:[%s169 + $0x78] sm:$0xff]
      %v194 = vld [vmem:[%s169 + $0x80] sm:$0xff]
      %v195 = vld [vmem:[%s169 + $0x88] sm:$0xff]
      %v196 = vld [vmem:[%s169 + $0x90] sm:$0xff]
      %v197 = vld [vmem:[%s169 + $0x98] sm:$0xff]
      %v198 = vld [vmem:[%s169 + $0xa0] sm:$0xff]
      %v199 = vld [vmem:[%s169 + $0xa8] sm:$0xff]
      %v200 = vld [vmem:[%s169 + $0xb0] sm:$0xff]
      %v201 = vld [vmem:[%s169 + $0xb8] sm:$0xff]
      %v202 = vld [vmem:[%s169 + $0xc0] sm:$0xff]
      %v203 = vld [vmem:[%s169 + $0xc8] sm:$0xff]
      %v204 = vld [vmem:[%s169 + $0xd0] sm:$0xff]
      %v205 = vld [vmem:[%s169 + $0xd8] sm:$0xff]
      %v206 = vld [vmem:[%s169 + $0xe0] sm:$0xff]
      %v207 = vld [vmem:[%s169 + $0xe8] sm:$0xff]
      %v208 = vld [vmem:[%s169 + $0xf0] sm:$0xff]
      %v209 = vld [vmem:[%s169 + $0xf8] sm:$0xff]
      %v210 = vld [vmem:[%s1] sm:$0xf]
      %v211 = vld [vmem:[%s1 + $0x4] sm:$0xf]
      %v212 = vld [vmem:[%s1 + $0x8] sm:$0xf]
      %v213 = vld [vmem:[%s1 + $0xc] sm:$0xf]
      %v214 = vld [vmem:[%s1 + $0x10] sm:$0xf]
      %v215 = vld [vmem:[%s1 + $0x14] sm:$0xf]
      %v216 = vld [vmem:[%s1 + $0x18] sm:$0xf]
      %v217 = vld [vmem:[%s1 + $0x1c] sm:$0xf]
      %v218 = vld [vmem:[%s1 + $0x20] sm:$0xf]
      %v219 = vld [vmem:[%s1 + $0x24] sm:$0xf]
      %v220 = vld [vmem:[%s1 + $0x28] sm:$0xf]
      %v221 = vld [vmem:[%s1 + $0x2c] sm:$0xf]
      %v222 = vld [vmem:[%s1 + $0x30] sm:$0xf]
      %v223 = vld [vmem:[%s1 + $0x34] sm:$0xf]
      %v224 = vld [vmem:[%s1 + $0x38] sm:$0xf]
      %v225 = vld [vmem:[%s1 + $0x3c] sm:$0xf]
      %v226 = vld [vmem:[%s1 + $0x40] sm:$0xf]
      %v227 = vld [vmem:[%s1 + $0x44] sm:$0xf]
      %v228 = vld [vmem:[%s1 + $0x48] sm:$0x3]
      %v229 = vld [vmem:[%s2] sm:$0x1]
      %v231 = vlaneseq
      %v232 = vshrl.u32 %v231, 7
      %v233 = vsub.s32 0, %v232
      %v234 = vrot.slane %v229, %v233
      %v268 = vunpack.c.l.b16 %v178
      %v269 = vunpack.c.h.b16 %v178
      %v270 = vunpack.c.l.b16 %v179
      %v271 = vunpack.c.h.b16 %v179
      %v272 = vunpack.c.l.b16 %v180
      %v273 = vunpack.c.h.b16 %v180
      %v274 = vunpack.c.l.b16 %v181
      %v275 = vunpack.c.h.b16 %v181
      %v276 = vunpack.c.l.b16 %v182
      %v277 = vunpack.c.h.b16 %v182
      %v278 = vunpack.c.l.b16 %v183
      %v279 = vunpack.c.h.b16 %v183
      %v280 = vunpack.c.l.b16 %v184
      %v281 = vunpack.c.h.b16 %v184
      %v282 = vunpack.c.l.b16 %v185
      %v283 = vunpack.c.h.b16 %v185
      %v284 = vunpack.c.l.b16 %v186
      %v285 = vunpack.c.h.b16 %v186
      %v286 = vunpack.c.l.b16 %v187
      %v287 = vunpack.c.h.b16 %v187
      %v288 = vunpack.c.l.b16 %v188
      %v289 = vunpack.c.h.b16 %v188
      %v290 = vunpack.c.l.b16 %v189
      %v291 = vunpack.c.h.b16 %v189
      %v292 = vunpack.c.l.b16 %v190
      %v293 = vunpack.c.h.b16 %v190
      %v294 = vunpack.c.l.b16 %v191
      %v295 = vunpack.c.h.b16 %v191
      %v296 = vunpack.c.l.b16 %v192
      %v297 = vunpack.c.h.b16 %v192
      %v298 = vunpack.c.l.b16 %v193
      %v299 = vunpack.c.h.b16 %v193
      %v300 = vunpack.c.l.b16 %v194
      %v301 = vunpack.c.h.b16 %v194
      %v302 = vunpack.c.l.b16 %v195
      %v303 = vunpack.c.h.b16 %v195
      %v304 = vunpack.c.l.b16 %v196
      %v305 = vunpack.c.h.b16 %v196
      %v306 = vunpack.c.l.b16 %v197
      %v307 = vunpack.c.h.b16 %v197
      %v308 = vunpack.c.l.b16 %v198
      %v309 = vunpack.c.h.b16 %v198
      %v310 = vunpack.c.l.b16 %v199
      %v311 = vunpack.c.h.b16 %v199
      %v312 = vunpack.c.l.b16 %v200
      %v313 = vunpack.c.h.b16 %v200
      %v314 = vunpack.c.l.b16 %v201
      %v315 = vunpack.c.h.b16 %v201
      %v316 = vunpack.c.l.b16 %v202
      %v317 = vunpack.c.h.b16 %v202
      %v318 = vunpack.c.l.b16 %v203
      %v319 = vunpack.c.h.b16 %v203
      %v320 = vunpack.c.l.b16 %v204
      %v321 = vunpack.c.h.b16 %v204
      %v322 = vunpack.c.l.b16 %v205
      %v323 = vunpack.c.h.b16 %v205
      %v324 = vunpack.c.l.b16 %v206
      %v325 = vunpack.c.h.b16 %v206
      %v326 = vunpack.c.l.b16 %v207
      %v327 = vunpack.c.h.b16 %v207
      %v328 = vunpack.c.l.b16 %v208
      %v329 = vunpack.c.h.b16 %v208
      %v330 = vunpack.c.l.b16 %v209
      %v331 = vunpack.c.h.b16 %v209
      %v332 = vpack.c.b16 %v270, %v268
      %v333 = vpack.c.b16 %v271, %v269
      %v334 = vpack.c.b16 %v274, %v272
      %v335 = vpack.c.b16 %v275, %v273
      %v336 = vpack.c.b16 %v278, %v276
      %v337 = vpack.c.b16 %v279, %v277
      %v338 = vpack.c.b16 %v282, %v280
      %v339 = vpack.c.b16 %v283, %v281
      %v340 = vpack.c.b16 %v286, %v284
      %v341 = vpack.c.b16 %v287, %v285
      %v342 = vpack.c.b16 %v290, %v288
      %v343 = vpack.c.b16 %v291, %v289
      %v344 = vpack.c.b16 %v294, %v292
      %v345 = vpack.c.b16 %v295, %v293
      %v346 = vpack.c.b16 %v298, %v296
      %v347 = vpack.c.b16 %v299, %v297
      %v348 = vpack.c.b16 %v302, %v300
      %v349 = vpack.c.b16 %v303, %v301
      %v350 = vpack.c.b16 %v306, %v304
      %v351 = vpack.c.b16 %v307, %v305
      %v352 = vpack.c.b16 %v310, %v308
      %v353 = vpack.c.b16 %v311, %v309
      %v354 = vpack.c.b16 %v314, %v312
      %v355 = vpack.c.b16 %v315, %v313
      %v356 = vpack.c.b16 %v318, %v316
      %v357 = vpack.c.b16 %v319, %v317
      %v358 = vpack.c.b16 %v322, %v320
      %v359 = vpack.c.b16 %v323, %v321
      %v360 = vpack.c.b16 %v326, %v324
      %v361 = vpack.c.b16 %v327, %v325
      %v362 = vpack.c.b16 %v330, %v328
      %v363 = vpack.c.b16 %v331, %v329
      %v399 = vunpack.c.l.b16 %v210
      %v400 = vunpack.c.l.b16 %v211
      %v401 = vunpack.c.l.b16 %v212
      %v402 = vunpack.c.l.b16 %v213
      %v403 = vunpack.c.l.b16 %v214
      %v404 = vunpack.c.l.b16 %v215
      %v405 = vunpack.c.l.b16 %v216
      %v406 = vunpack.c.l.b16 %v217
      %v407 = vunpack.c.l.b16 %v218
      %v408 = vunpack.c.l.b16 %v219
      %v409 = vunpack.c.l.b16 %v220
      %v410 = vunpack.c.l.b16 %v221
      %v411 = vunpack.c.l.b16 %v222
      %v412 = vunpack.c.l.b16 %v223
      %v413 = vunpack.c.l.b16 %v224
      %v414 = vunpack.c.l.b16 %v225
      %v415 = vunpack.c.l.b16 %v226
      %v416 = vunpack.c.l.b16 %v227
      %v417 = vunpack.c.l.b16 %v228
      %v418 = vpack.c.b16 %v400, %v399
      %v419 = vpack.c.b16 %v402, %v401
      %v420 = vpack.c.b16 %v404, %v403
      %v421 = vpack.c.b16 %v406, %v405
      %v422 = vpack.c.b16 %v408, %v407
      %v423 = vpack.c.b16 %v410, %v409
      %v424 = vpack.c.b16 %v412, %v411
      %v425 = vpack.c.b16 %v414, %v413
      %v426 = vpack.c.b16 %v416, %v415
      %v427 = vpack.c.b16 %v417, %v417
      %vm437 = vcmask 154624
      %v439 = vsel %vm437, %v333, 0
      %v442 = vsel %vm437, %v335, 0
      %v445 = vsel %vm437, %v337, 0
      %v448 = vsel %vm437, %v339, 0
      %v451 = vsel %vm437, %v341, 0
      %v454 = vsel %vm437, %v343, 0
      %v457 = vsel %vm437, %v345, 0
      %v460 = vsel %vm437, %v347, 0
      %v463 = vsel %vm437, %v349, 0
      %v466 = vsel %vm437, %v351, 0
      %v469 = vsel %vm437, %v353, 0
      %v472 = vsel %vm437, %v355, 0
      %v475 = vsel %vm437, %v357, 0
      %v478 = vsel %vm437, %v359, 0
      %v481 = vsel %vm437, %v361, 0
      %v484 = vsel %vm437, %v363, 0
      %vm486 = vcmask 1040384
      %vm487 = vcmask 1041408
      %v488 = vsel %vm486, 4294967295, 65535
      %v489 = vsel %vm487, %v488, 0
      %v491 = vand.u32 %v427, %v489
      %493 = vmatprep.subr.bf16.mxu0 0
      %494 = vmatpush1.bf16.msra.mxu0 %v425
      %495 = vmatprep.subr.bf16.mxu0 0
      %496 = vmatpush1.bf16.msra.mxu0 %v424
      %497 = vmatprep.subr.bf16.mxu0 0
      %498 = vmatpush1.bf16.msra.mxu0 %v423
      %499 = vmatprep.subr.bf16.mxu0 0
      %500 = vmatpush1.bf16.msra.mxu0 %v422
      %501 = vmatprep.subr.bf16.mxu0 0
      %502 = vmatpush1.bf16.msra.mxu0 %v421
      %503 = vmatprep.subr.bf16.mxu0 0
      %504 = vmatpush1.bf16.msra.mxu0 %v420
      %505 = vmatprep.subr.bf16.mxu0 0
      %506 = vmatpush1.bf16.msra.mxu0 %v419
      %507 = vmatprep.subr.bf16.mxu0 0
      %508 = vmatpush1.bf16.msra.mxu0 %v418
      %509 = vmatprep.subr.bf16.mxu0 0
      %510 = vmatpush2.bf16.msra.mxu0 0
      %511 = vmatprep.subr.bf16.mxu0 0
      %512 = vmatpush2.bf16.msra.mxu0 0
      %513 = vmatprep.subr.bf16.mxu0 0
      %514 = vmatpush2.bf16.msra.mxu0 0
      %515 = vmatprep.subr.bf16.mxu0 0
      %516 = vmatpush2.bf16.msra.mxu0 0
      %517 = vmatprep.subr.bf16.mxu0 0
      %518 = vmatpush2.bf16.msra.mxu0 0
      %519 = vmatprep.subr.bf16.mxu0 0
      %520 = vmatpush2.bf16.msra.mxu0 0
      %521 = vmatprep.subr.bf16.mxu0 0
      %522 = vmatpush2.bf16.msra.mxu0 %v491
      %523 = vmatprep.subr.bf16.mxu0 0
      %524 = vmatpush2.bf16.msra.mxu0 %v426
      %525 = vmatprep.mubr.bf16.mxu0 %v439
      %526 = vmatmul.mubr.bf16.gmra.mxu0 %v332
      %v527 = vpop.f32.mrf.mxu0
      %v528 = vadd.f32 %v234, %v527
      %v529 = vpop.f32.mrf.mxu0
      %v530 = vpop.f32.mrf.mxu0
      %v531 = vadd.f32 %v234, %v530
      %v532 = vpop.f32.mrf.mxu0
      %533 = vmatprep.mubr.bf16.mxu0 %v442
      %534 = vmatmul.mubr.bf16.gmra.mxu0 %v334
      %v535 = vpop.f32.mrf.mxu0
      %v536 = vadd.f32 %v234, %v535
      %v537 = vpop.f32.mrf.mxu0
      %v538 = vpop.f32.mrf.mxu0
      %v539 = vadd.f32 %v234, %v538
      %v540 = vpop.f32.mrf.mxu0
      %541 = vmatprep.mubr.bf16.mxu0 %v445
      %542 = vmatmul.mubr.bf16.gmra.mxu0 %v336
      %v543 = vpop.f32.mrf.mxu0
      %v544 = vadd.f32 %v234, %v543
      %v545 = vpop.f32.mrf.mxu0
      %v546 = vpop.f32.mrf.mxu0
      %v547 = vadd.f32 %v234, %v546
      %v548 = vpop.f32.mrf.mxu0
      %549 = vmatprep.mubr.bf16.mxu0 %v448
      %550 = vmatmul.mubr.bf16.gmra.mxu0 %v338
      %v551 = vpop.f32.mrf.mxu0
      %v552 = vadd.f32 %v234, %v551
      %v553 = vpop.f32.mrf.mxu0
      %v554 = vpop.f32.mrf.mxu0
      %v555 = vadd.f32 %v234, %v554
      %v556 = vpop.f32.mrf.mxu0
      %557 = vmatprep.mubr.bf16.mxu0 %v451
      %558 = vmatmul.mubr.bf16.gmra.mxu0 %v340
      %v559 = vpop.f32.mrf.mxu0
      %v560 = vadd.f32 %v234, %v559
      %v561 = vpop.f32.mrf.mxu0
      %v562 = vpop.f32.mrf.mxu0
      %v563 = vadd.f32 %v234, %v562
      %v564 = vpop.f32.mrf.mxu0
      %565 = vmatprep.mubr.bf16.mxu0 %v454
      %566 = vmatmul.mubr.bf16.gmra.mxu0 %v342
      %v567 = vpop.f32.mrf.mxu0
      %v568 = vadd.f32 %v234, %v567
      %v569 = vpop.f32.mrf.mxu0
      %v570 = vpop.f32.mrf.mxu0
      %v571 = vadd.f32 %v234, %v570
      %v572 = vpop.f32.mrf.mxu0
      %573 = vmatprep.mubr.bf16.mxu0 %v457
      %574 = vmatmul.mubr.bf16.gmra.mxu0 %v344
      %v575 = vpop.f32.mrf.mxu0
      %v576 = vadd.f32 %v234, %v575
      %v577 = vpop.f32.mrf.mxu0
      %v578 = vpop.f32.mrf.mxu0
      %v579 = vadd.f32 %v234, %v578
      %v580 = vpop.f32.mrf.mxu0
      %581 = vmatprep.mubr.bf16.mxu0 %v460
      %582 = vmatmul.mubr.bf16.gmra.mxu0 %v346
      %v583 = vpop.f32.mrf.mxu0
      %v584 = vadd.f32 %v234, %v583
      %v585 = vpop.f32.mrf.mxu0
      %v586 = vpop.f32.mrf.mxu0
      %v587 = vadd.f32 %v234, %v586
      %v588 = vpop.f32.mrf.mxu0
      %589 = vmatprep.mubr.bf16.mxu0 %v463
      %590 = vmatmul.mubr.bf16.gmra.mxu0 %v348
      %v591 = vpop.f32.mrf.mxu0
      %v592 = vadd.f32 %v234, %v591
      %v593 = vpop.f32.mrf.mxu0
      %v594 = vpop.f32.mrf.mxu0
      %v595 = vadd.f32 %v234, %v594
      %v596 = vpop.f32.mrf.mxu0
      %597 = vmatprep.mubr.bf16.mxu0 %v466
      %598 = vmatmul.mubr.bf16.gmra.mxu0 %v350
      %v599 = vpop.f32.mrf.mxu0
      %v600 = vadd.f32 %v234, %v599
      %v601 = vpop.f32.mrf.mxu0
      %v602 = vpop.f32.mrf.mxu0
      %v603 = vadd.f32 %v234, %v602
      %v604 = vpop.f32.mrf.mxu0
      %605 = vmatprep.mubr.bf16.mxu0 %v469
      %606 = vmatmul.mubr.bf16.gmra.mxu0 %v352
      %v607 = vpop.f32.mrf.mxu0
      %v608 = vadd.f32 %v234, %v607
      %v609 = vpop.f32.mrf.mxu0
      %v610 = vpop.f32.mrf.mxu0
      %v611 = vadd.f32 %v234, %v610
      %v612 = vpop.f32.mrf.mxu0
      %613 = vmatprep.mubr.bf16.mxu0 %v472
      %614 = vmatmul.mubr.bf16.gmra.mxu0 %v354
      %v615 = vpop.f32.mrf.mxu0
      %v616 = vadd.f32 %v234, %v615
      %v617 = vpop.f32.mrf.mxu0
      %v618 = vpop.f32.mrf.mxu0
      %v619 = vadd.f32 %v234, %v618
      %v620 = vpop.f32.mrf.mxu0
      %621 = vmatprep.mubr.bf16.mxu0 %v475
      %622 = vmatmul.mubr.bf16.gmra.mxu0 %v356
      %v623 = vpop.f32.mrf.mxu0
      %v624 = vadd.f32 %v234, %v623
      %v625 = vpop.f32.mrf.mxu0
      %v626 = vpop.f32.mrf.mxu0
      %v627 = vadd.f32 %v234, %v626
      %v628 = vpop.f32.mrf.mxu0
      %629 = vmatprep.mubr.bf16.mxu0 %v478
      %630 = vmatmul.mubr.bf16.gmra.mxu0 %v358
      %v631 = vpop.f32.mrf.mxu0
      %v632 = vadd.f32 %v234, %v631
      %v633 = vpop.f32.mrf.mxu0
      %v634 = vpop.f32.mrf.mxu0
      %v635 = vadd.f32 %v234, %v634
      %v636 = vpop.f32.mrf.mxu0
      %637 = vmatprep.mubr.bf16.mxu0 %v481
      %638 = vmatmul.mubr.bf16.gmra.mxu0 %v360
      %v639 = vpop.f32.mrf.mxu0
      %v640 = vadd.f32 %v234, %v639
      %v641 = vpop.f32.mrf.mxu0
      %v642 = vpop.f32.mrf.mxu0
      %v643 = vadd.f32 %v234, %v642
      %v644 = vpop.f32.mrf.mxu0
      %645 = vmatprep.mubr.bf16.mxu0 %v484
      %646 = vmatmul.mubr.bf16.gmra.mxu0 %v362
      %v647 = vpop.f32.mrf.mxu0
      %v648 = vadd.f32 %v234, %v647
      %v649 = vpop.f32.mrf.mxu0
      %v650 = vpop.f32.mrf.mxu0
      %v651 = vadd.f32 %v234, %v650
      %v652 = vpop.f32.mrf.mxu0
      %653 = vdwg.mxu0
      %v654 = vpack.c.bf16 %v531, %v528
      %v655 = vpack.c.bf16 %v539, %v536
      %v656 = vpack.c.bf16 %v547, %v544
      %v657 = vpack.c.bf16 %v555, %v552
      %v658 = vpack.c.bf16 %v563, %v560
      %v659 = vpack.c.bf16 %v571, %v568
      %v660 = vpack.c.bf16 %v579, %v576
      %v661 = vpack.c.bf16 %v587, %v584
      %v662 = vpack.c.bf16 %v595, %v592
      %v663 = vpack.c.bf16 %v603, %v600
      %v664 = vpack.c.bf16 %v611, %v608
      %v665 = vpack.c.bf16 %v619, %v616
      %v666 = vpack.c.bf16 %v627, %v624
      %v667 = vpack.c.bf16 %v635, %v632
      %v668 = vpack.c.bf16 %v643, %v640
      %v669 = vpack.c.bf16 %v651, %v648
      %v686 = vunpack.c.l.b16 %v654
      %v687 = vunpack.c.h.b16 %v654
      %v688 = vunpack.c.l.b16 %v655
      %v689 = vunpack.c.h.b16 %v655
      %v690 = vunpack.c.l.b16 %v656
      %v691 = vunpack.c.h.b16 %v656
      %v692 = vunpack.c.l.b16 %v657
      %v693 = vunpack.c.h.b16 %v657
      %v694 = vunpack.c.l.b16 %v658
      %v695 = vunpack.c.h.b16 %v658
      %v696 = vunpack.c.l.b16 %v659
      %v697 = vunpack.c.h.b16 %v659
      %v698 = vunpack.c.l.b16 %v660
      %v699 = vunpack.c.h.b16 %v660
      %v700 = vunpack.c.l.b16 %v661
      %v701 = vunpack.c.h.b16 %v661
      %v702 = vunpack.c.l.b16 %v662
      %v703 = vunpack.c.h.b16 %v662
      %v704 = vunpack.c.l.b16 %v663
      %v705 = vunpack.c.h.b16 %v663
      %v706 = vunpack.c.l.b16 %v664
      %v707 = vunpack.c.h.b16 %v664
      %v708 = vunpack.c.l.b16 %v665
      %v709 = vunpack.c.h.b16 %v665
      %v710 = vunpack.c.l.b16 %v666
      %v711 = vunpack.c.h.b16 %v666
      %v712 = vunpack.c.l.b16 %v667
      %v713 = vunpack.c.h.b16 %v667
      %v714 = vunpack.c.l.b16 %v668
      %v715 = vunpack.c.h.b16 %v668
      %v716 = vunpack.c.l.b16 %v669
      %v717 = vunpack.c.h.b16 %v669
      %v718 = vpack.c.b16 %v686, %v686
      %v719 = vpack.c.b16 %v687, %v687
      %v720 = vpack.c.b16 %v688, %v688
      %v721 = vpack.c.b16 %v689, %v689
      %v722 = vpack.c.b16 %v690, %v690
      %v723 = vpack.c.b16 %v691, %v691
      %v724 = vpack.c.b16 %v692, %v692
      %v725 = vpack.c.b16 %v693, %v693
      %v726 = vpack.c.b16 %v694, %v694
      %v727 = vpack.c.b16 %v695, %v695
      %v728 = vpack.c.b16 %v696, %v696
      %v729 = vpack.c.b16 %v697, %v697
      %v730 = vpack.c.b16 %v698, %v698
      %v731 = vpack.c.b16 %v699, %v699
      %v732 = vpack.c.b16 %v700, %v700
      %v733 = vpack.c.b16 %v701, %v701
      %v734 = vpack.c.b16 %v702, %v702
      %v735 = vpack.c.b16 %v703, %v703
      %v736 = vpack.c.b16 %v704, %v704
      %v737 = vpack.c.b16 %v705, %v705
      %v738 = vpack.c.b16 %v706, %v706
      %v739 = vpack.c.b16 %v707, %v707
      %v740 = vpack.c.b16 %v708, %v708
      %v741 = vpack.c.b16 %v709, %v709
      %v742 = vpack.c.b16 %v710, %v710
      %v743 = vpack.c.b16 %v711, %v711
      %v744 = vpack.c.b16 %v712, %v712
      %v745 = vpack.c.b16 %v713, %v713
      %v746 = vpack.c.b16 %v714, %v714
      %v747 = vpack.c.b16 %v715, %v715
      %v748 = vpack.c.b16 %v716, %v716
      %v749 = vpack.c.b16 %v717, %v717
      %vm782 = vcmask 257024
      %783 = vst.msk [vmem:[%s175] sm:$0xf] %vm782, %v718
      %784 = vst.msk [vmem:[%s175 + $0x4] sm:$0xf] %vm782, %v719
      %785 = vst.msk [vmem:[%s175 + $0x8] sm:$0xf] %vm782, %v720
      %786 = vst.msk [vmem:[%s175 + $0xc] sm:$0xf] %vm782, %v721
      %787 = vst.msk [vmem:[%s175 + $0x10] sm:$0xf] %vm782, %v722
      %788 = vst.msk [vmem:[%s175 + $0x14] sm:$0xf] %vm782, %v723
      %789 = vst.msk [vmem:[%s175 + $0x18] sm:$0xf] %vm782, %v724
      %790 = vst.msk [vmem:[%s175 + $0x1c] sm:$0xf] %vm782, %v725
      %791 = vst.msk [vmem:[%s175 + $0x20] sm:$0xf] %vm782, %v726
      %792 = vst.msk [vmem:[%s175 + $0x24] sm:$0xf] %vm782, %v727
      %793 = vst.msk [vmem:[%s175 + $0x28] sm:$0xf] %vm782, %v728
      %794 = vst.msk [vmem:[%s175 + $0x2c] sm:$0xf] %vm782, %v729
      %795 = vst.msk [vmem:[%s175 + $0x30] sm:$0xf] %vm782, %v730
      %796 = vst.msk [vmem:[%s175 + $0x34] sm:$0xf] %vm782, %v731
      %797 = vst.msk [vmem:[%s175 + $0x38] sm:$0xf] %vm782, %v732
      %798 = vst.msk [vmem:[%s175 + $0x3c] sm:$0xf] %vm782, %v733
      %799 = vst.msk [vmem:[%s175 + $0x40] sm:$0xf] %vm782, %v734
      %800 = vst.msk [vmem:[%s175 + $0x44] sm:$0xf] %vm782, %v735
      %801 = vst.msk [vmem:[%s175 + $0x48] sm:$0xf] %vm782, %v736
      %802 = vst.msk [vmem:[%s175 + $0x4c] sm:$0xf] %vm782, %v737
      %803 = vst.msk [vmem:[%s175 + $0x50] sm:$0xf] %vm782, %v738
      %804 = vst.msk [vmem:[%s175 + $0x54] sm:$0xf] %vm782, %v739
      %805 = vst.msk [vmem:[%s175 + $0x58] sm:$0xf] %vm782, %v740
      %806 = vst.msk [vmem:[%s175 + $0x5c] sm:$0xf] %vm782, %v741
      %807 = vst.msk [vmem:[%s175 + $0x60] sm:$0xf] %vm782, %v742
      %808 = vst.msk [vmem:[%s175 + $0x64] sm:$0xf] %vm782, %v743
      %809 = vst.msk [vmem:[%s175 + $0x68] sm:$0xf] %vm782, %v744
      %810 = vst.msk [vmem:[%s175 + $0x6c] sm:$0xf] %vm782, %v745
      %811 = vst.msk [vmem:[%s175 + $0x70] sm:$0xf] %vm782, %v746
      %812 = vst.msk [vmem:[%s175 + $0x74] sm:$0xf] %vm782, %v747
      %813 = vst.msk [vmem:[%s175 + $0x78] sm:$0xf] %vm782, %v748
      %814 = vst.msk [vmem:[%s175 + $0x7c] sm:$0xf] %vm782, %v749
      %s815 = smul.u32 32, %s14
      %p816 = scmp.lt.s32.totalorder %s815, 63
      %s817 = scalar_select %p816, %s815, 63
      %s818 = smul.addr %s817, 4
      %s819 = scalar_lea.vmem %s3, %s818
      // Predicated region
      $region33: #{linear_pallas.1} parent=31 // pred_check
        %p820 = pneg %p100
      $region34: #{linear_pallas.1} parent=31 // pred_check_branch
        %822 = sbr.rel (%p820) target = $region36
      $region35: #{linear_pallas.1} parent=31 // pred_region
        %s823 = smul.u32 32, %s14
      $region36: #{linear_pallas.1} parent=31 // pred_fallthru
        _
    $region32: #{linear_pallas.1} parent=5 // pred_fallthru
      _
    %p824 = scmp.le.s32.totalorder 2, %s9
    // Predicated region
    $region37: #{linear_pallas.1} parent=5 // pred_check
      %p825 = pneg %p824
    $region38: #{linear_pallas.1} parent=5 // pred_check_branch
      %827 = sbr.rel (%p825) target = $region40
    $region39: #{linear_pallas.1} parent=5 // pred_region
      %s828 = ssub.s32 %s9, 2
      // Predicated region
      $region41: #{linear_pallas.1} parent=39 // pred_check
        %p829 = pneg %p106
      $region42: #{linear_pallas.1} parent=39 // pred_check_branch
        %831 = sbr.rel (%p829) target = $region44
      $region43: #{linear_pallas.1} parent=39 // pred_region
        %s832 = smul.u32 32, %s15
        %p833 = scmp.lt.s32.totalorder %s832, 63
        %s834 = scalar_select %p833, %s832, 63
        %s835 = smul.addr %s834, 4
        %s836 = scalar_lea.vmem %s3, %s835
      $region44: #{linear_pallas.1} parent=39 // pred_fallthru
        _
    $region40: #{linear_pallas.1} parent=5 // pred_fallthru
      _
  $region6: #{linear_pallas.1} parent=0 // loop_footer
    %s13 = sadd.s32 1, %s9
  $region7: #{linear_pallas.1} parent=0 // loop_footer_branch
    %8 = sbr.rel target = $region3
  $region8: #{linear_pallas.1} parent=0 // loop_exit
    _

</llo_original>
